<compile_context>
chip_gen: v7x
topology: tpu7x:2x2x1
jax: 0.10.0
libtpu: 0.0.40
codegen_flags: <defaults>
</compile_context>

<pallas_src>
import functools

import jax
import jax.numpy as jnp
from jax.experimental import pallas as pl
from jax.experimental.pallas import tpu as pltpu


def _round_up(n, m):
    return ((n + m - 1) // m) * m


def _device_kind():
    try:
        return jax.devices()[0].device_kind.lower()
    except Exception:
        return ""


def _lane_pad(d, kind):
    # v6e/v7x MXUs are 256 wide: pad lane/N dims > 128 to 256-multiples so the
    # array columns are fully filled.  v5e (128x128 MXU) and unknown chips keep
    # 128-multiples (256-pad there is pure extra DMA/MXU passes).  Dims <= 128
    # stay at 128 (blowing tiny layers up 4x is not worth it).
    if d > 128 and kind and ("v5" not in kind) and ("v4" not in kind):
        return _round_up(d, 256)
    return _round_up(d, 128)


def _pick_batch_tile(batch):
    # Tiles are multiples of 16 (bf16 sublane packing).  Prefer >= 2 grid
    # steps (v7x megacore sharding), then minimal padded rows, then the
    # largest tile (per-step overhead / MXU fill).
    cands = [256, 128, 64]
    if batch < 64:
        cands += [32, 16]
    best = None
    for t in cands:
        bp = _round_up(batch, t)
        steps = bp // t
        pad = bp - batch
        key = (steps < 2, pad, -t)
        if best is None or key < best[0]:
            best = (key, t, bp)
    _, tb, batch_p = best
    return tb, batch_p


def _mlp_kernel(num_hidden_layers, relu_bf16, *refs):
    """refs = (x_ref, [W_0, b_0, ..., W_{L-2}, b_{L-2}], Vw, Vb, out_ref).

    Weights are pre-transposed to (in, out) and bf16; biases are fp32 (1, out)
    rows; x is bf16.  Hidden layers: h = relu(h @ W + b); output layer:
    y = h @ Vw + Vb.  fp32 MXU accumulation throughout.
    """
    x_ref = refs[0]
    param_refs = refs[1:-1]
    o_ref = refs[-1]

    h = x_ref[...]  # bf16 (tb, hidden_p)
    idx = 0
    for _ in range(num_hidden_layers):
        w = param_refs[idx][...]        # bf16 (hidden_p, hidden_p), pre-transposed
        b = param_refs[idx + 1][...]    # f32  (1, hidden_p)
        idx += 2
        acc = jnp.dot(h, w, preferred_element_type=jnp.float32) + b
        if relu_bf16:
            # v6e/v7x: bf16 VPU -> halve VALU work/vreg pressure on the tail.
            h = jnp.maximum(acc.astype(jnp.bfloat16), 0)
        else:
            # v5e has no bf16 VPU: ReLU in fp32, downcast only for the MXU.
            h = jnp.maximum(acc, 0.0).astype(jnp.bfloat16)
    vw = param_refs[idx][...]           # bf16 (hidden_p, out_p), pre-transposed
    vb = param_refs[idx + 1][...]       # f32  (1, out_p)
    y = jnp.dot(h, vw, preferred_element_type=jnp.float32) + vb
    o_ref[...] = y.astype(o_ref.dtype)


def prepare_mlp_params(u_params, v_params):
    """One-time host-side weight prep: transpose PyTorch (out,in) weights to
    (in,out), zero-pad to lane multiples, cast to bf16; biases stay fp32.
    Reuse the returned dict across calls (this is the expensive part of the
    per-call path otherwise)."""
    kind = _device_kind()
    vw, vb = v_params
    hidden = u_params[0][0].shape[1] if u_params else vw.shape[1]
    out_dim = vw.shape[0]
    hidden_p = _lane_pad(hidden, kind)
    out_p = _lane_pad(out_dim, kind)

    flat = []
    for w, b in u_params:
        wt = jnp.zeros((hidden_p, hidden_p), jnp.bfloat16)
        wt = wt.at[:hidden, :hidden].set(w.T.astype(jnp.bfloat16))
        bp = jnp.zeros((1, hidden_p), jnp.float32)
        bp = bp.at[0, :hidden].set(b.astype(jnp.float32))
        flat += [wt, bp]
    vwt = jnp.zeros((hidden_p, out_p), jnp.bfloat16)
    vwt = vwt.at[:hidden, :out_dim].set(vw.T.astype(jnp.bfloat16))
    vbp = jnp.zeros((1, out_p), jnp.float32)
    vbp = vbp.at[0, :out_dim].set(vb.astype(jnp.float32))
    flat += [vwt, vbp]

    return {
        "flat": tuple(jax.block_until_ready(p) for p in flat),
        "num_hidden_layers": len(u_params),
        "hidden": hidden,
        "hidden_p": hidden_p,
        "out_dim": out_dim,
        "out_p": out_p,
    }


def mlp_forward(x, prepared, *, out_dtype=jnp.float32):
    """x: (batch, hidden) fp32.  prepared: output of prepare_mlp_params().
    Returns (batch, output_dim) in out_dtype."""
    batch, hidden = x.shape
    assert hidden == prepared["hidden"], "hidden_dim mismatch vs prepared params"
    hidden_p = prepared["hidden_p"]
    out_p = prepared["out_p"]
    out_dim = prepared["out_dim"]
    flat = list(prepared["flat"])
    nhl = prepared["num_hidden_layers"]

    tb, batch_p = _pick_batch_tile(batch)

    # Per-call activation prep only: zero-pad + bf16 cast.
    x_p = jnp.zeros((batch_p, hidden_p), jnp.bfloat16)
    x_p = x_p.at[:batch, :hidden].set(x.astype(jnp.bfloat16))

    kind = _device_kind()
    relu_bf16 = bool(kind) and ("v5" not in kind) and ("v4" not in kind)
    kernel = functools.partial(_mlp_kernel, nhl, relu_bf16)

    grid = (batch_p // tb,)
    x_spec = pl.BlockSpec((tb, hidden_p), lambda i: (i, 0))
    out_spec = pl.BlockSpec((tb, out_p), lambda i: (i, 0))

    out_itemsize = jnp.dtype(out_dtype).itemsize
    param_bytes = sum(int(p.nbytes) for p in flat)
    flops = 2 * batch_p * hidden_p * hidden_p * nhl + 2 * batch_p * hidden_p * out_p
    cost = pl.CostEstimate(
        flops=int(flops),
        transcendentals=0,
        bytes_accessed=int(param_bytes + x_p.nbytes + batch_p * out_p * out_itemsize),
    )

    # Per-generation VMEM cap (scoped limit, leave headroom below physical).
    if "v7" in kind:
        vmem_cap = 56 * 1024 * 1024
    elif kind:
        vmem_cap = 100 * 1024 * 1024
    else:
        vmem_cap = 64 * 1024 * 1024

    def _run(single_buffer_weights):
        # Weights/biases: full-array blocks with a constant index_map stay
        # resident across batch tiles (never re-fetched).  Buffered(1) drops
        # the useless second pipeline buffer so their VMEM footprint isn't
        # doubled (matters most on v7x's 64 MiB VMEM).
        if single_buffer_weights:
            param_specs = [
                pl.BlockSpec(p.shape, lambda i: (0, 0), pipeline_mode=pl.Buffered(1))
                for p in flat
            ]
        else:
            param_specs = [pl.BlockSpec(p.shape, lambda i: (0, 0)) for p in flat]

        weight_bufs = 1 if single_buffer_weights else 2
        vmem_bytes = int(1.2 * (weight_bufs * param_bytes
                                + 2 * tb * hidden_p * 2          # bf16 x tile, 2 bufs
                                + 2 * tb * out_p * out_itemsize  # out tile, 2 bufs
                                )) + (2 << 20)
        vmem_bytes = min(max(vmem_bytes, 16 * 1024 * 1024), vmem_cap)

        return pl.pallas_call(
            kernel,
            out_shape=jax.ShapeDtypeStruct((batch_p, out_p), out_dtype),
            grid=grid,
            in_specs=[x_spec] + param_specs,
            out_specs=out_spec,
            compiler_params=pltpu.CompilerParams(
                dimension_semantics=("parallel",),
                vmem_limit_bytes=vmem_bytes,
            ),
            cost_estimate=cost,
        )(x_p, *flat)

    try:
        y_padded = _run(single_buffer_weights=True)
    except Exception:
        # pipeline_mode=pl.Buffered(1) unsupported on this jax version:
        # fall back to default (double-buffered) weight blocks.
        y_padded = _run(single_buffer_weights=False)

    # TODO(synk): when resident single-buffered weights exceed the per-core
    # VMEM cap (hidden ~2k+ on v7x), keep the batch tile large and stream
    # weights layer-by-layer inside the kernel (memory_space=pl.ANY +
    # pltpu.emit_pipeline / manual double-buffered make_async_copy over
    # layers) so each weight crosses HBM->VMEM once per core; do NOT add a
    # K grid axis (that multiplies weight HBM traffic by the batch-tile count).
    return y_padded[:batch, :out_dim]


def init_mlp_params(key, hidden_dim, output_dim, L=2):
    """Deterministic synthetic init (PyTorch-Linear-like uniform fan-in scale).
    Weights kept in PyTorch (out, in) layout."""
    u_params = []
    for _ in range(L - 1):
        key, kw, kb = jax.random.split(key, 3)
        bound = 1.0 / jnp.sqrt(hidden_dim)
        w = jax.random.uniform(kw, (hidden_dim, hidden_dim), jnp.float32, -bound, bound)
        b = jax.random.uniform(kb, (hidden_dim,), jnp.float32, -bound, bound)
        u_params.append((w, b))
    key, kw, kb = jax.random.split(key, 3)
    bound = 1.0 / jnp.sqrt(hidden_dim)
    vw = jax.random.uniform(kw, (output_dim, hidden_dim), jnp.float32, -bound, bound)
    vb = jax.random.uniform(kb, (output_dim,), jnp.float32, -bound, bound)
    return u_params, (vw, vb)


def mlp_reference(x, u_params, v_params):
    h = x
    for w, b in u_params:
        h = jnp.maximum(h @ w.T + b, 0.0)
    vw, vb = v_params
    return h @ vw.T + vb


if __name__ == "__main__":
    batch, hidden_dim, output_dim, L = 8, 32, 16, 2

    key = jax.random.PRNGKey(0)
    key, kx = jax.random.split(key)
    x = jax.random.normal(kx, (batch, hidden_dim), jnp.float32)

    u_params, v_params = init_mlp_params(key, hidden_dim, output_dim, L=L)

    # Prepare (pad/transpose/cast) the weights once; reuse across calls.
    prepared = prepare_mlp_params(u_params, v_params)

    y = mlp_forward(x, prepared)
    y = jax.block_until_ready(y)

    # Second call reuses the prepared weights (only x is padded/cast per call).
    y2 = jax.block_until_ready(mlp_forward(x, prepared))

    y_ref = mlp_reference(x, u_params, v_params)
    assert y.shape == (batch, output_dim)
    # bf16 MXU operands with fp32 accumulation -> looser tolerance than fp32.
    assert jnp.allclose(y, y_ref, atol=5e-2, rtol=5e-2), "mismatch vs reference"
    assert jnp.allclose(y2, y, atol=1e-6, rtol=1e-6), "non-deterministic result"

    print("KERNEL_OK")
</pallas_src>

<mosaic_0001>
module attributes {stable_mosaic.version = 11 : i64} {
  func.func @_mlp_kernel(%arg0: i32, %arg1: memref<16x128xbf16, #tpu.memory_space<vmem>>, %arg2: memref<128x128xbf16, #tpu.memory_space<vmem>>, %arg3: memref<1x128xf32, #tpu.memory_space<vmem>>, %arg4: memref<128x128xbf16, #tpu.memory_space<vmem>>, %arg5: memref<1x128xf32, #tpu.memory_space<vmem>>, %arg6: memref<16x128xf32, #tpu.memory_space<vmem>>) attributes {dimension_semantics = [#tpu.dimension_semantics<parallel>], iteration_bounds = array<i64: 1>, scalar_prefetch = 0 : i64, scratch_operands = 0 : i64, tpu.core_type = #tpu.core_type<tc>, window_params = [{transform_indices = @transform_0, window_bounds = array<i64: 16, 128>}, {pipeline_mode = #tpu.pipeline_mode<synchronous>, transform_indices = @transform_1, window_bounds = array<i64: 128, 128>}, {pipeline_mode = #tpu.pipeline_mode<synchronous>, transform_indices = @transform_2, window_bounds = array<i64: 1, 128>}, {pipeline_mode = #tpu.pipeline_mode<synchronous>, transform_indices = @transform_3, window_bounds = array<i64: 128, 128>}, {pipeline_mode = #tpu.pipeline_mode<synchronous>, transform_indices = @transform_4, window_bounds = array<i64: 1, 128>}, {transform_indices = @transform_5, window_bounds = array<i64: 16, 128>}]} {
    %c0 = arith.constant 0 : index
    %c0_0 = arith.constant 0 : index
    %0 = vector.load %arg1[%c0, %c0_0] : memref<16x128xbf16, #tpu.memory_space<vmem>>, vector<16x128xbf16>
    %c0_1 = arith.constant 0 : index
    %c0_2 = arith.constant 0 : index
    %1 = vector.load %arg2[%c0_1, %c0_2] : memref<128x128xbf16, #tpu.memory_space<vmem>>, vector<128x128xbf16>
    %c0_3 = arith.constant 0 : index
    %c0_4 = arith.constant 0 : index
    %2 = vector.load %arg3[%c0_3, %c0_4] : memref<1x128xf32, #tpu.memory_space<vmem>>, vector<1x128xf32>
    %cst = arith.constant dense<0.000000e+00> : vector<16x128xf32>
    %3 = tpu.matmul %0, %1, %cst {dimension_numbers = #tpu.dot_dimension_numbers<[1], [0], [0], [1], [0, 0, 1, 1], [], []>} : vector<16x128xbf16>, vector<128x128xbf16>, vector<16x128xf32> -> vector<16x128xf32>
    %4 = vector.broadcast %2 : vector<1x128xf32> to vector<16x128xf32>
    %5 = arith.addf %3, %4 : vector<16x128xf32>
    %6 = arith.truncf %5 : vector<16x128xf32> to vector<16x128xbf16>
    %cst_5 = arith.constant 0.000000e+00 : bf16
    %7 = vector.broadcast %cst_5 : bf16 to vector<16x128xbf16>
    %8 = arith.maximumf %6, %7 : vector<16x128xbf16>
    %c0_6 = arith.constant 0 : index
    %c0_7 = arith.constant 0 : index
    %9 = vector.load %arg4[%c0_6, %c0_7] : memref<128x128xbf16, #tpu.memory_space<vmem>>, vector<128x128xbf16>
    %c0_8 = arith.constant 0 : index
    %c0_9 = arith.constant 0 : index
    %10 = vector.load %arg5[%c0_8, %c0_9] : memref<1x128xf32, #tpu.memory_space<vmem>>, vector<1x128xf32>
    %cst_10 = arith.constant dense<0.000000e+00> : vector<16x128xf32>
    %11 = tpu.matmul %8, %9, %cst_10 {dimension_numbers = #tpu.dot_dimension_numbers<[1], [0], [0], [1], [0, 0, 1, 1], [], []>} : vector<16x128xbf16>, vector<128x128xbf16>, vector<16x128xf32> -> vector<16x128xf32>
    %12 = vector.broadcast %10 : vector<1x128xf32> to vector<16x128xf32>
    %13 = arith.addf %11, %12 : vector<16x128xf32>
    %c0_11 = arith.constant 0 : index
    %c0_12 = arith.constant 0 : index
    %14 = vector.load %arg6[%c0_11, %c0_12] : memref<16x128xf32, #tpu.memory_space<vmem>>, vector<16x128xf32>
    tpu.vector_store %arg6[%c0_11, %c0_12], %13 {strides = array<i32>} : memref<16x128xf32, #tpu.memory_space<vmem>>, vector<16x128xf32>,
    return
  }
  func.func @transform_0(%arg0: i32) -> (i32, i32) {
    %c0_i32 = arith.constant 0 : i32
    %c0_i32_0 = arith.constant 0 : i32
    return %arg0, %c0_i32 : i32, i32
  }
  func.func @transform_1(%arg0: i32) -> (i32, i32) {
    %c0_i32 = arith.constant 0 : i32
    %c0_i32_0 = arith.constant 0 : i32
    %c0_i32_1 = arith.constant 0 : i32
    return %c0_i32, %c0_i32_0 : i32, i32
  }
  func.func @transform_2(%arg0: i32) -> (i32, i32) {
    %c0_i32 = arith.constant 0 : i32
    %c0_i32_0 = arith.constant 0 : i32
    %c0_i32_1 = arith.constant 0 : i32
    return %c0_i32, %c0_i32_0 : i32, i32
  }
  func.func @transform_3(%arg0: i32) -> (i32, i32) {
    %c0_i32 = arith.constant 0 : i32
    %c0_i32_0 = arith.constant 0 : i32
    %c0_i32_1 = arith.constant 0 : i32
    return %c0_i32, %c0_i32_0 : i32, i32
  }
  func.func @transform_4(%arg0: i32) -> (i32, i32) {
    %c0_i32 = arith.constant 0 : i32
    %c0_i32_0 = arith.constant 0 : i32
    %c0_i32_1 = arith.constant 0 : i32
    return %c0_i32, %c0_i32_0 : i32, i32
  }
  func.func @transform_5(%arg0: i32) -> (i32, i32) {
    %c0_i32 = arith.constant 0 : i32
    %c0_i32_0 = arith.constant 0 : i32
    return %arg0, %c0_i32 : i32, i32
  }
}

module attributes {stable_mosaic.version = 11 : i64} {
  func.func @_mlp_kernel(%arg0: i32, %arg1: memref<16x128xbf16, #tpu.memory_space<vmem>>, %arg2: memref<128x128xbf16, #tpu.memory_space<vmem>>, %arg3: memref<1x128xf32, #tpu.memory_space<vmem>>, %arg4: memref<128x128xbf16, #tpu.memory_space<vmem>>, %arg5: memref<1x128xf32, #tpu.memory_space<vmem>>, %arg6: memref<16x128xf32, #tpu.memory_space<vmem>>) attributes {dimension_semantics = [#tpu.dimension_semantics<parallel>], iteration_bounds = array<i64: 1>, scalar_prefetch = 0 : i64, scratch_operands = 0 : i64, tpu.core_type = #tpu.core_type<tc>, window_params = [{transform_indices = @transform_0, window_bounds = array<i64: 16, 128>}, {pipeline_mode = #tpu.pipeline_mode<synchronous>, transform_indices = @transform_1, window_bounds = array<i64: 128, 128>}, {pipeline_mode = #tpu.pipeline_mode<synchronous>, transform_indices = @transform_2, window_bounds = array<i64: 1, 128>}, {pipeline_mode = #tpu.pipeline_mode<synchronous>, transform_indices = @transform_3, window_bounds = array<i64: 128, 128>}, {pipeline_mode = #tpu.pipeline_mode<synchronous>, transform_indices = @transform_4, window_bounds = array<i64: 1, 128>}, {transform_indices = @transform_5, window_bounds = array<i64: 16, 128>}]} {
    %c0 = arith.constant 0 : index
    %c0_0 = arith.constant 0 : index
    %0 = vector.load %arg1[%c0, %c0_0] : memref<16x128xbf16, #tpu.memory_space<vmem>>, vector<16x128xbf16>
    %c0_1 = arith.constant 0 : index
    %c0_2 = arith.constant 0 : index
    %1 = vector.load %arg2[%c0_1, %c0_2] : memref<128x128xbf16, #tpu.memory_space<vmem>>, vector<128x128xbf16>
    %c0_3 = arith.constant 0 : index
    %c0_4 = arith.constant 0 : index
    %2 = vector.load %arg3[%c0_3, %c0_4] : memref<1x128xf32, #tpu.memory_space<vmem>>, vector<1x128xf32>
    %cst = arith.constant dense<0.000000e+00> : vector<16x128xf32>
    %3 = tpu.matmul %0, %1, %cst {dimension_numbers = #tpu.dot_dimension_numbers<[1], [0], [0], [1], [0, 0, 1, 1], [], []>} : vector<16x128xbf16>, vector<128x128xbf16>, vector<16x128xf32> -> vector<16x128xf32>
    %4 = vector.broadcast %2 : vector<1x128xf32> to vector<16x128xf32>
    %5 = arith.addf %3, %4 : vector<16x128xf32>
    %6 = arith.truncf %5 : vector<16x128xf32> to vector<16x128xbf16>
    %cst_5 = arith.constant 0.000000e+00 : bf16
    %7 = vector.broadcast %cst_5 : bf16 to vector<16x128xbf16>
    %8 = arith.maximumf %6, %7 : vector<16x128xbf16>
    %c0_6 = arith.constant 0 : index
    %c0_7 = arith.constant 0 : index
    %9 = vector.load %arg4[%c0_6, %c0_7] : memref<128x128xbf16, #tpu.memory_space<vmem>>, vector<128x128xbf16>
    %c0_8 = arith.constant 0 : index
    %c0_9 = arith.constant 0 : index
    %10 = vector.load %arg5[%c0_8, %c0_9] : memref<1x128xf32, #tpu.memory_space<vmem>>, vector<1x128xf32>
    %cst_10 = arith.constant dense<0.000000e+00> : vector<16x128xf32>
    %11 = tpu.matmul %8, %9, %cst_10 {dimension_numbers = #tpu.dot_dimension_numbers<[1], [0], [0], [1], [0, 0, 1, 1], [], []>} : vector<16x128xbf16>, vector<128x128xbf16>, vector<16x128xf32> -> vector<16x128xf32>
    %12 = vector.broadcast %10 : vector<1x128xf32> to vector<16x128xf32>
    %13 = arith.addf %11, %12 : vector<16x128xf32>
    %c0_11 = arith.constant 0 : index
    %c0_12 = arith.constant 0 : index
    %14 = vector.load %arg6[%c0_11, %c0_12] : memref<16x128xf32, #tpu.memory_space<vmem>>, vector<16x128xf32>
    tpu.vector_store %arg6[%c0_11, %c0_12], %13 {strides = array<i32>} : memref<16x128xf32, #tpu.memory_space<vmem>>, vector<16x128xf32>,
    return
  }
  func.func @transform_0(%arg0: i32) -> (i32, i32) {
    %c0_i32 = arith.constant 0 : i32
    %c0_i32_0 = arith.constant 0 : i32
    return %arg0, %c0_i32 : i32, i32
  }
  func.func @transform_1(%arg0: i32) -> (i32, i32) {
    %c0_i32 = arith.constant 0 : i32
    %c0_i32_0 = arith.constant 0 : i32
    %c0_i32_1 = arith.constant 0 : i32
    return %c0_i32, %c0_i32_0 : i32, i32
  }
  func.func @transform_2(%arg0: i32) -> (i32, i32) {
    %c0_i32 = arith.constant 0 : i32
    %c0_i32_0 = arith.constant 0 : i32
    %c0_i32_1 = arith.constant 0 : i32
    return %c0_i32, %c0_i32_0 : i32, i32
  }
  func.func @transform_3(%arg0: i32) -> (i32, i32) {
    %c0_i32 = arith.constant 0 : i32
    %c0_i32_0 = arith.constant 0 : i32
    %c0_i32_1 = arith.constant 0 : i32
    return %c0_i32, %c0_i32_0 : i32, i32
  }
  func.func @transform_4(%arg0: i32) -> (i32, i32) {
    %c0_i32 = arith.constant 0 : i32
    %c0_i32_0 = arith.constant 0 : i32
    %c0_i32_1 = arith.constant 0 : i32
    return %c0_i32, %c0_i32_0 : i32, i32
  }
  func.func @transform_5(%arg0: i32) -> (i32, i32) {
    %c0_i32 = arith.constant 0 : i32
    %c0_i32_0 = arith.constant 0 : i32
    return %arg0, %c0_i32 : i32, i32
  }
}

</mosaic_0001>

<llo_original>
// kernel: tpu_custom_call.1
$region0: #{tpu_custom_call.1}
  #allocation0 [shape = 'u32[]', space=smem, size = 0x4, offset = 0x4, fixed_abs, tag = 'smem constant byte address 0x4 - core index']
  #allocation1 [shape = 'u32[144,128]{1,0:T(1,128)}', space=vmem, size = 0x12000, scoped, tag = 'internal scratch']
  %s0 = inlined_call_operand.hbm [shape: bf16[16,128], index: 0, kind: input, shape index: {}]
  %s1 = inlined_call_operand.hbm [shape: bf16[128,128], index: 1, kind: input, shape index: {}]
  %s2 = inlined_call_operand.vmem [shape: f32[1,128], index: 2, kind: input, shape index: {}]
  %s3 = inlined_call_operand.hbm [shape: bf16[128,128], index: 3, kind: input, shape index: {}]
  %s4 = inlined_call_operand.vmem [shape: f32[1,128], index: 4, kind: input, shape index: {}]
  %s5 = inlined_call_operand.hbm [shape: f32[16,128], index: 5, kind: output, shape index: {}]
  %s6 = sld [smem:[#allocation0]]
  $region42: #{tpu_custom_call.1} parent=0
    _
  %s8 = ssub.s32 1, %s6
  %s9 = scalar_select 0, %s8, %s6
  $region1: #{tpu_custom_call.1} parent=0
    #allocation2 [shape = 'u8[4096]{0}', space=vmem, size = 0x1000, scoped, tag = 'input window, operand 0, single buffered']
    #allocation3 [shape = 's32[1]{0}', space=sflag, size = 0x4, scoped, tag = 'scoped memory for tpu_custom_call.1']
    #allocation4 [shape = 's32[1]{0}', space=sflag, size = 0x4, scoped, tag = 'scoped memory for tpu_custom_call.1']
    #allocation5 [shape = 'u8[32768]{0}', space=vmem, size = 0x8000, scoped, tag = 'input window, operand 1, single buffered']
    #allocation6 [shape = 's32[1]{0}', space=sflag, size = 0x4, scoped, tag = 'scoped memory for tpu_custom_call.1']
    #allocation7 [shape = 'u8[32768]{0}', space=vmem, size = 0x8000, scoped, tag = 'input window, operand 3, single buffered']
    #allocation8 [shape = 'u8[8192]{0}', space=vmem, size = 0x2000, scoped, tag = 'output window, operand 0, single buffered']
    %10 = vsyncpa [#allocation3], 0
    %11 = vsyncpa [#allocation6], 0
    %12 = vsyncpa [#allocation4], 0
    // Predicated region
    $region2: #{tpu_custom_call.1} parent=1 // pred_check
      _
    $region3: #{tpu_custom_call.1} parent=1 // pred_check_branch
      %14 = sbr.rel (0) target = $region5
    $region4: #{tpu_custom_call.1} parent=1 // pred_region
      %s16 = ssub.s32 128, 128
      %17 = vsyncadd [#allocation3], %s16
      %s18 = sshll.u32 [#allocation2], 4
      %s19 = int_to_ptr.vmem [resolvable:$true] %s18
      %24 = dma.hbm_to_vmem [thread:$0]  %s0, 128, %s19, [#allocation3], 64, 64, 4
    $region5: #{tpu_custom_call.1} parent=1 // pred_fallthru
      _
    // Predicated region
    $region6: #{tpu_custom_call.1} parent=1 // pred_check
      _
    $region7: #{tpu_custom_call.1} parent=1 // pred_check_branch
      %26 = sbr.rel (0) target = $region9
    $region8: #{tpu_custom_call.1} parent=1 // pred_region
      %s28 = ssub.s32 1024, 1024
      %29 = vsyncadd [#allocation6], %s28
      %s30 = sshll.u32 [#allocation5], 4
      %s31 = int_to_ptr.vmem [resolvable:$true] %s30
      %36 = dma.hbm_to_vmem [thread:$0]  %s1, 1024, %s31, [#allocation6], 64, 64, 4
    $region9: #{tpu_custom_call.1} parent=1 // pred_fallthru
      _
    // Predicated region
    $region10: #{tpu_custom_call.1} parent=1 // pred_check
      _
    $region11: #{tpu_custom_call.1} parent=1 // pred_check_branch
      %38 = sbr.rel (0) target = $region13
    $region12: #{tpu_custom_call.1} parent=1 // pred_region
      _
    $region13: #{tpu_custom_call.1} parent=1 // pred_fallthru
      _
    // Predicated region
    $region14: #{tpu_custom_call.1} parent=1 // pred_check
      _
    $region15: #{tpu_custom_call.1} parent=1 // pred_check_branch
      %40 = sbr.rel (0) target = $region17
    $region16: #{tpu_custom_call.1} parent=1 // pred_region
      %s42 = ssub.s32 1024, 1024
      %43 = vsyncadd [#allocation6], %s42
      %s44 = sshll.u32 [#allocation7], 4
      %s45 = int_to_ptr.vmem [resolvable:$true] %s44
      %50 = dma.hbm_to_vmem [thread:$0]  %s3, 1024, %s45, [#allocation6], 64, 64, 4
    $region17: #{tpu_custom_call.1} parent=1 // pred_fallthru
      _
    // Predicated region
    $region18: #{tpu_custom_call.1} parent=1 // pred_check
      _
    $region19: #{tpu_custom_call.1} parent=1 // pred_check_branch
      %52 = sbr.rel (0) target = $region21
    $region20: #{tpu_custom_call.1} parent=1 // pred_region
      _
    $region21: #{tpu_custom_call.1} parent=1 // pred_fallthru
      _
    // Predicated region
    $region22: #{tpu_custom_call.1} parent=1 // pred_check
      _
    $region23: #{tpu_custom_call.1} parent=1 // pred_check_branch
      %54 = sbr.rel (0) target = $region25
    $region24: #{tpu_custom_call.1} parent=1 // pred_region
      %55 = dma.done [#allocation3], 128
    $region25: #{tpu_custom_call.1} parent=1 // pred_fallthru
      _
    // Predicated region
    $region26: #{tpu_custom_call.1} parent=1 // pred_check
      _
    $region27: #{tpu_custom_call.1} parent=1 // pred_check_branch
      %57 = sbr.rel (0) target = $region29
    $region28: #{tpu_custom_call.1} parent=1 // pred_region
      %58 = dma.done [#allocation6], 1024
    $region29: #{tpu_custom_call.1} parent=1 // pred_fallthru
      _
    // Predicated region
    $region30: #{tpu_custom_call.1} parent=1 // pred_check
      _
    $region31: #{tpu_custom_call.1} parent=1 // pred_check_branch
      %60 = sbr.rel (0) target = $region33
    $region32: #{tpu_custom_call.1} parent=1 // pred_region
      %61 = dma.done [#allocation6], 1024
    $region33: #{tpu_custom_call.1} parent=1 // pred_fallthru
      _
    %v63 = vld [vmem:[#allocation2] sm:$0xf]
    %v64 = vld [vmem:[#allocation2 + $0x4] sm:$0xf]
    %v65 = vld [vmem:[#allocation5] sm:$0xf]
    %v66 = vld [vmem:[#allocation5 + $0x4] sm:$0xf]
    %v67 = vld [vmem:[#allocation5 + $0x8] sm:$0xf]
    %v68 = vld [vmem:[#allocation5 + $0xc] sm:$0xf]
    %v69 = vld [vmem:[#allocation5 + $0x10] sm:$0xf]
    %v70 = vld [vmem:[#allocation5 + $0x14] sm:$0xf]
    %v71 = vld [vmem:[#allocation5 + $0x18] sm:$0xf]
    %v72 = vld [vmem:[#allocation5 + $0x1c] sm:$0xf]
    %v73 = vld [vmem:[#allocation5 + $0x20] sm:$0xf]
    %v74 = vld [vmem:[#allocation5 + $0x24] sm:$0xf]
    %v75 = vld [vmem:[#allocation5 + $0x28] sm:$0xf]
    %v76 = vld [vmem:[#allocation5 + $0x2c] sm:$0xf]
    %v77 = vld [vmem:[#allocation5 + $0x30] sm:$0xf]
    %v78 = vld [vmem:[#allocation5 + $0x34] sm:$0xf]
    %v79 = vld [vmem:[#allocation5 + $0x38] sm:$0xf]
    %v80 = vld [vmem:[#allocation5 + $0x3c] sm:$0xf]
    %v81 = vld [vmem:[%s2] sm:$0x1]
    %v83 = vlaneseq
    %v84 = vshrl.u32 %v83, 7
    %v85 = vsub.s32 0, %v84
    %v86 = vrot.slane %v81, %v85
    %v90 = vunpack.c.l.b16 %v63
    %v91 = vunpack.c.l.b16 %v64
    %v92 = vpack.c.b16 %v91, %v90
    %v110 = vunpack.c.l.b16 %v65
    %v111 = vunpack.c.l.b16 %v66
    %v112 = vunpack.c.l.b16 %v67
    %v113 = vunpack.c.l.b16 %v68
    %v114 = vunpack.c.l.b16 %v69
    %v115 = vunpack.c.l.b16 %v70
    %v116 = vunpack.c.l.b16 %v71
    %v117 = vunpack.c.l.b16 %v72
    %v118 = vunpack.c.l.b16 %v73
    %v119 = vunpack.c.l.b16 %v74
    %v120 = vunpack.c.l.b16 %v75
    %v121 = vunpack.c.l.b16 %v76
    %v122 = vunpack.c.l.b16 %v77
    %v123 = vunpack.c.l.b16 %v78
    %v124 = vunpack.c.l.b16 %v79
    %v125 = vunpack.c.l.b16 %v80
    %v126 = vpack.c.b16 %v111, %v110
    %v127 = vpack.c.b16 %v113, %v112
    %v128 = vpack.c.b16 %v115, %v114
    %v129 = vpack.c.b16 %v117, %v116
    %v130 = vpack.c.b16 %v119, %v118
    %v131 = vpack.c.b16 %v121, %v120
    %v132 = vpack.c.b16 %v123, %v122
    %v133 = vpack.c.b16 %v125, %v124
    %142 = vmatprep.subr.bf16.mxu0 0
    %143 = vmatpush1.bf16.msra.mxu0 %v126
    %144 = vmatprep.subr.bf16.mxu0 0
    %145 = vmatpush1.bf16.msra.mxu0 %v127
    %146 = vmatprep.subr.bf16.mxu0 0
    %147 = vmatpush1.bf16.msra.mxu0 %v128
    %148 = vmatprep.subr.bf16.mxu0 0
    %149 = vmatpush1.bf16.msra.mxu0 %v129
    %150 = vmatprep.subr.bf16.mxu0 0
    %151 = vmatpush1.bf16.msra.mxu0 %v130
    %152 = vmatprep.subr.bf16.mxu0 0
    %153 = vmatpush1.bf16.msra.mxu0 %v131
    %154 = vmatprep.subr.bf16.mxu0 0
    %155 = vmatpush1.bf16.msra.mxu0 %v132
    %156 = vmatprep.subr.bf16.mxu0 0
    %157 = vmatpush1.bf16.msra.mxu0 %v133
    %158 = vmatprep.subr.bf16.mxu0 0
    %159 = vmatpush1.bf16.msra.mxu0 0
    %160 = vmatprep.subr.bf16.mxu0 0
    %161 = vmatpush1.bf16.msra.mxu0 0
    %162 = vmatprep.subr.bf16.mxu0 0
    %163 = vmatpush1.bf16.msra.mxu0 0
    %164 = vmatprep.subr.bf16.mxu0 0
    %165 = vmatpush1.bf16.msra.mxu0 0
    %166 = vmatprep.subr.bf16.mxu0 0
    %167 = vmatpush1.bf16.msra.mxu0 0
    %168 = vmatprep.subr.bf16.mxu0 0
    %169 = vmatpush1.bf16.msra.mxu0 0
    %170 = vmatprep.subr.bf16.mxu0 0
    %171 = vmatpush1.bf16.msra.mxu0 0
    %172 = vmatprep.subr.bf16.mxu0 0
    %173 = vmatpush1.bf16.msra.mxu0 0
    %174 = vmatprep.mubr.bf16.mxu0 0
    %175 = vmatmul.mubr.bf16.gmra.mrb[0].mxu0 %v92
    %v176 = vpop.f32.mrb[0].mxu0
    %v177 = vadd.f32 %v86, %v176
    %v178 = vpop.f32.mrb[0].mxu0
    %v179 = vpop.f32.mrb[0].mxu0
    %v180 = vadd.f32 %v86, %v179
    %v181 = vpop.f32.mrb[0].mxu0
    %182 = vdwg.mxu0
    %v183 = vpack.c.bf16 %v180, %v177
    %v184 = vmax.bf16 %v183, 0
    %v185 = vld [vmem:[#allocation7] sm:$0xf]
    %v186 = vld [vmem:[#allocation7 + $0x4] sm:$0xf]
    %v187 = vld [vmem:[#allocation7 + $0x8] sm:$0xf]
    %v188 = vld [vmem:[#allocation7 + $0xc] sm:$0xf]
    %v189 = vld [vmem:[#allocation7 + $0x10] sm:$0xf]
    %v190 = vld [vmem:[#allocation7 + $0x14] sm:$0xf]
    %v191 = vld [vmem:[#allocation7 + $0x18] sm:$0xf]
    %v192 = vld [vmem:[#allocation7 + $0x1c] sm:$0xf]
    %v193 = vld [vmem:[#allocation7 + $0x20] sm:$0xf]
    %v194 = vld [vmem:[#allocation7 + $0x24] sm:$0xf]
    %v195 = vld [vmem:[#allocation7 + $0x28] sm:$0xf]
    %v196 = vld [vmem:[#allocation7 + $0x2c] sm:$0xf]
    %v197 = vld [vmem:[#allocation7 + $0x30] sm:$0xf]
    %v198 = vld [vmem:[#allocation7 + $0x34] sm:$0xf]
    %v199 = vld [vmem:[#allocation7 + $0x38] sm:$0xf]
    %v200 = vld [vmem:[#allocation7 + $0x3c] sm:$0xf]
    %v201 = vld [vmem:[%s4] sm:$0x1]
    %v203 = vlaneseq
    %v204 = vshrl.u32 %v203, 7
    %v205 = vsub.s32 0, %v204
    %v206 = vrot.slane %v201, %v205
    %v224 = vunpack.c.l.b16 %v185
    %v225 = vunpack.c.l.b16 %v186
    %v226 = vunpack.c.l.b16 %v187
    %v227 = vunpack.c.l.b16 %v188
    %v228 = vunpack.c.l.b16 %v189
    %v229 = vunpack.c.l.b16 %v190
    %v230 = vunpack.c.l.b16 %v191
    %v231 = vunpack.c.l.b16 %v192
    %v232 = vunpack.c.l.b16 %v193
    %v233 = vunpack.c.l.b16 %v194
    %v234 = vunpack.c.l.b16 %v195
    %v235 = vunpack.c.l.b16 %v196
    %v236 = vunpack.c.l.b16 %v197
    %v237 = vunpack.c.l.b16 %v198
    %v238 = vunpack.c.l.b16 %v199
    %v239 = vunpack.c.l.b16 %v200
    %v240 = vpack.c.b16 %v225, %v224
    %v241 = vpack.c.b16 %v227, %v226
    %v242 = vpack.c.b16 %v229, %v228
    %v243 = vpack.c.b16 %v231, %v230
    %v244 = vpack.c.b16 %v233, %v232
    %v245 = vpack.c.b16 %v235, %v234
    %v246 = vpack.c.b16 %v237, %v236
    %v247 = vpack.c.b16 %v239, %v238
    %256 = vmatprep.subr.bf16.mxu0 0
    %257 = vmatpush1.bf16.msra.mxu0 %v240
    %258 = vmatprep.subr.bf16.mxu0 0
    %259 = vmatpush1.bf16.msra.mxu0 %v241
    %260 = vmatprep.subr.bf16.mxu0 0
    %261 = vmatpush1.bf16.msra.mxu0 %v242
    %262 = vmatprep.subr.bf16.mxu0 0
    %263 = vmatpush1.bf16.msra.mxu0 %v243
    %264 = vmatprep.subr.bf16.mxu0 0
    %265 = vmatpush1.bf16.msra.mxu0 %v244
    %266 = vmatprep.subr.bf16.mxu0 0
    %267 = vmatpush1.bf16.msra.mxu0 %v245
    %268 = vmatprep.subr.bf16.mxu0 0
    %269 = vmatpush1.bf16.msra.mxu0 %v246
    %270 = vmatprep.subr.bf16.mxu0 0
    %271 = vmatpush1.bf16.msra.mxu0 %v247
    %272 = vmatprep.subr.bf16.mxu0 0
    %273 = vmatpush1.bf16.msra.mxu0 0
    %274 = vmatprep.subr.bf16.mxu0 0
    %275 = vmatpush1.bf16.msra.mxu0 0
    %276 = vmatprep.subr.bf16.mxu0 0
    %277 = vmatpush1.bf16.msra.mxu0 0
    %278 = vmatprep.subr.bf16.mxu0 0
    %279 = vmatpush1.bf16.msra.mxu0 0
    %280 = vmatprep.subr.bf16.mxu0 0
    %281 = vmatpush1.bf16.msra.mxu0 0
    %282 = vmatprep.subr.bf16.mxu0 0
    %283 = vmatpush1.bf16.msra.mxu0 0
    %284 = vmatprep.subr.bf16.mxu0 0
    %285 = vmatpush1.bf16.msra.mxu0 0
    %286 = vmatprep.subr.bf16.mxu0 0
    %287 = vmatpush1.bf16.msra.mxu0 0
    %288 = vmatprep.mubr.bf16.mxu0 0
    %289 = vmatmul.mubr.bf16.gmra.mrb[0].mxu0 %v184
    %v290 = vpop.f32.mrb[0].mxu0
    %v291 = vadd.f32 %v206, %v290
    %v292 = vpop.f32.mrb[0].mxu0
    %v293 = vpop.f32.mrb[0].mxu0
    %v294 = vadd.f32 %v206, %v293
    %v295 = vpop.f32.mrb[0].mxu0
    %296 = vdwg.mxu0
    %297 = vst [vmem:[#allocation8] sm:$0xff] %v291
    %298 = vst [vmem:[#allocation8 + $0x8] sm:$0xff] %v294
    // Predicated region
    $region34: #{tpu_custom_call.1} parent=1 // pred_check
      _
    $region35: #{tpu_custom_call.1} parent=1 // pred_check_branch
      %300 = sbr.rel (0) target = $region37
    $region36: #{tpu_custom_call.1} parent=1 // pred_region
      %s302 = ssub.s32 256, 256
      %303 = vsyncadd [#allocation4], %s302
      %s304 = sshll.u32 [#allocation8], 4
      %s305 = int_to_ptr.vmem [resolvable:$true] %s304
      %310 = dma.vmem_to_hbm [thread:$0]  %s305, 256, %s5, [#allocation4], 128, 128, 8
    $region37: #{tpu_custom_call.1} parent=1 // pred_fallthru
      _
    // Predicated region
    $region38: #{tpu_custom_call.1} parent=1 // pred_check
      _
    $region39: #{tpu_custom_call.1} parent=1 // pred_check_branch
      %312 = sbr.rel (0) target = $region41
    $region40: #{tpu_custom_call.1} parent=1 // pred_region
      %313 = dma.done [#allocation4], 256
    $region41: #{tpu_custom_call.1} parent=1 // pred_fallthru
      _
    %314 = vsyncpa [#allocation3], 1
    %315 = vsyncpa [#allocation6], 1
    %316 = vsyncpa [#allocation4], 1

// kernel: tpu_custom_call.1
$region0: #{tpu_custom_call.1}
  #allocation0 [shape = 'u32[]', space=smem, size = 0x4, offset = 0x4, fixed_abs, tag = 'smem constant byte address 0x4 - core index']
  #allocation1 [shape = 'u32[144,128]{1,0:T(1,128)}', space=vmem, size = 0x12000, scoped, tag = 'internal scratch']
  %s0 = inlined_call_operand.hbm [shape: bf16[16,128], index: 0, kind: input, shape index: {}]
  %s1 = inlined_call_operand.hbm [shape: bf16[128,128], index: 1, kind: input, shape index: {}]
  %s2 = inlined_call_operand.vmem [shape: f32[1,128], index: 2, kind: input, shape index: {}]
  %s3 = inlined_call_operand.hbm [shape: bf16[128,128], index: 3, kind: input, shape index: {}]
  %s4 = inlined_call_operand.vmem [shape: f32[1,128], index: 4, kind: input, shape index: {}]
  %s5 = inlined_call_operand.hbm [shape: f32[16,128], index: 5, kind: output, shape index: {}]
  %s6 = sld [smem:[#allocation0]]
  $region42: #{tpu_custom_call.1} parent=0
    _
  %s8 = ssub.s32 1, %s6
  %s9 = scalar_select 0, %s8, %s6
  $region1: #{tpu_custom_call.1} parent=0
    #allocation2 [shape = 'u8[4096]{0}', space=vmem, size = 0x1000, scoped, tag = 'input window, operand 0, single buffered']
    #allocation3 [shape = 's32[1]{0}', space=sflag, size = 0x4, scoped, tag = 'scoped memory for tpu_custom_call.1']
    #allocation4 [shape = 's32[1]{0}', space=sflag, size = 0x4, scoped, tag = 'scoped memory for tpu_custom_call.1']
    #allocation5 [shape = 'u8[32768]{0}', space=vmem, size = 0x8000, scoped, tag = 'input window, operand 1, single buffered']
    #allocation6 [shape = 's32[1]{0}', space=sflag, size = 0x4, scoped, tag = 'scoped memory for tpu_custom_call.1']
    #allocation7 [shape = 'u8[32768]{0}', space=vmem, size = 0x8000, scoped, tag = 'input window, operand 3, single buffered']
    #allocation8 [shape = 'u8[8192]{0}', space=vmem, size = 0x2000, scoped, tag = 'output window, operand 0, single buffered']
    %10 = vsyncpa [#allocation3], 0
    %11 = vsyncpa [#allocation6], 0
    %12 = vsyncpa [#allocation4], 0
    // Predicated region
    $region2: #{tpu_custom_call.1} parent=1 // pred_check
      _
    $region3: #{tpu_custom_call.1} parent=1 // pred_check_branch
      %14 = sbr.rel (0) target = $region5
    $region4: #{tpu_custom_call.1} parent=1 // pred_region
      %s16 = ssub.s32 128, 128
      %17 = vsyncadd [#allocation3], %s16
      %s18 = sshll.u32 [#allocation2], 4
      %s19 = int_to_ptr.vmem [resolvable:$true] %s18
      %24 = dma.hbm_to_vmem [thread:$0]  %s0, 128, %s19, [#allocation3], 64, 64, 4
    $region5: #{tpu_custom_call.1} parent=1 // pred_fallthru
      _
    // Predicated region
    $region6: #{tpu_custom_call.1} parent=1 // pred_check
      _
    $region7: #{tpu_custom_call.1} parent=1 // pred_check_branch
      %26 = sbr.rel (0) target = $region9
    $region8: #{tpu_custom_call.1} parent=1 // pred_region
      %s28 = ssub.s32 1024, 1024
      %29 = vsyncadd [#allocation6], %s28
      %s30 = sshll.u32 [#allocation5], 4
      %s31 = int_to_ptr.vmem [resolvable:$true] %s30
      %36 = dma.hbm_to_vmem [thread:$0]  %s1, 1024, %s31, [#allocation6], 64, 64, 4
    $region9: #{tpu_custom_call.1} parent=1 // pred_fallthru
      _
    // Predicated region
    $region10: #{tpu_custom_call.1} parent=1 // pred_check
      _
    $region11: #{tpu_custom_call.1} parent=1 // pred_check_branch
      %38 = sbr.rel (0) target = $region13
    $region12: #{tpu_custom_call.1} parent=1 // pred_region
      _
    $region13: #{tpu_custom_call.1} parent=1 // pred_fallthru
      _
    // Predicated region
    $region14: #{tpu_custom_call.1} parent=1 // pred_check
      _
    $region15: #{tpu_custom_call.1} parent=1 // pred_check_branch
      %40 = sbr.rel (0) target = $region17
    $region16: #{tpu_custom_call.1} parent=1 // pred_region
      %s42 = ssub.s32 1024, 1024
      %43 = vsyncadd [#allocation6], %s42
      %s44 = sshll.u32 [#allocation7], 4
      %s45 = int_to_ptr.vmem [resolvable:$true] %s44
      %50 = dma.hbm_to_vmem [thread:$0]  %s3, 1024, %s45, [#allocation6], 64, 64, 4
    $region17: #{tpu_custom_call.1} parent=1 // pred_fallthru
      _
    // Predicated region
    $region18: #{tpu_custom_call.1} parent=1 // pred_check
      _
    $region19: #{tpu_custom_call.1} parent=1 // pred_check_branch
      %52 = sbr.rel (0) target = $region21
    $region20: #{tpu_custom_call.1} parent=1 // pred_region
      _
    $region21: #{tpu_custom_call.1} parent=1 // pred_fallthru
      _
    // Predicated region
    $region22: #{tpu_custom_call.1} parent=1 // pred_check
      _
    $region23: #{tpu_custom_call.1} parent=1 // pred_check_branch
      %54 = sbr.rel (0) target = $region25
    $region24: #{tpu_custom_call.1} parent=1 // pred_region
      %55 = dma.done [#allocation3], 128
    $region25: #{tpu_custom_call.1} parent=1 // pred_fallthru
      _
    // Predicated region
    $region26: #{tpu_custom_call.1} parent=1 // pred_check
      _
    $region27: #{tpu_custom_call.1} parent=1 // pred_check_branch
      %57 = sbr.rel (0) target = $region29
    $region28: #{tpu_custom_call.1} parent=1 // pred_region
      %58 = dma.done [#allocation6], 1024
    $region29: #{tpu_custom_call.1} parent=1 // pred_fallthru
      _
    // Predicated region
    $region30: #{tpu_custom_call.1} parent=1 // pred_check
      _
    $region31: #{tpu_custom_call.1} parent=1 // pred_check_branch
      %60 = sbr.rel (0) target = $region33
    $region32: #{tpu_custom_call.1} parent=1 // pred_region
      %61 = dma.done [#allocation6], 1024
    $region33: #{tpu_custom_call.1} parent=1 // pred_fallthru
      _
    %v63 = vld [vmem:[#allocation2] sm:$0xf]
    %v64 = vld [vmem:[#allocation2 + $0x4] sm:$0xf]
    %v65 = vld [vmem:[#allocation5] sm:$0xf]
    %v66 = vld [vmem:[#allocation5 + $0x4] sm:$0xf]
    %v67 = vld [vmem:[#allocation5 + $0x8] sm:$0xf]
    %v68 = vld [vmem:[#allocation5 + $0xc] sm:$0xf]
    %v69 = vld [vmem:[#allocation5 + $0x10] sm:$0xf]
    %v70 = vld [vmem:[#allocation5 + $0x14] sm:$0xf]
    %v71 = vld [vmem:[#allocation5 + $0x18] sm:$0xf]
    %v72 = vld [vmem:[#allocation5 + $0x1c] sm:$0xf]
    %v73 = vld [vmem:[#allocation5 + $0x20] sm:$0xf]
    %v74 = vld [vmem:[#allocation5 + $0x24] sm:$0xf]
    %v75 = vld [vmem:[#allocation5 + $0x28] sm:$0xf]
    %v76 = vld [vmem:[#allocation5 + $0x2c] sm:$0xf]
    %v77 = vld [vmem:[#allocation5 + $0x30] sm:$0xf]
    %v78 = vld [vmem:[#allocation5 + $0x34] sm:$0xf]
    %v79 = vld [vmem:[#allocation5 + $0x38] sm:$0xf]
    %v80 = vld [vmem:[#allocation5 + $0x3c] sm:$0xf]
    %v81 = vld [vmem:[%s2] sm:$0x1]
    %v83 = vlaneseq
    %v84 = vshrl.u32 %v83, 7
    %v85 = vsub.s32 0, %v84
    %v86 = vrot.slane %v81, %v85
    %v90 = vunpack.c.l.b16 %v63
    %v91 = vunpack.c.l.b16 %v64
    %v92 = vpack.c.b16 %v91, %v90
    %v110 = vunpack.c.l.b16 %v65
    %v111 = vunpack.c.l.b16 %v66
    %v112 = vunpack.c.l.b16 %v67
    %v113 = vunpack.c.l.b16 %v68
    %v114 = vunpack.c.l.b16 %v69
    %v115 = vunpack.c.l.b16 %v70
    %v116 = vunpack.c.l.b16 %v71
    %v117 = vunpack.c.l.b16 %v72
    %v118 = vunpack.c.l.b16 %v73
    %v119 = vunpack.c.l.b16 %v74
    %v120 = vunpack.c.l.b16 %v75
    %v121 = vunpack.c.l.b16 %v76
    %v122 = vunpack.c.l.b16 %v77
    %v123 = vunpack.c.l.b16 %v78
    %v124 = vunpack.c.l.b16 %v79
    %v125 = vunpack.c.l.b16 %v80
    %v126 = vpack.c.b16 %v111, %v110
    %v127 = vpack.c.b16 %v113, %v112
    %v128 = vpack.c.b16 %v115, %v114
    %v129 = vpack.c.b16 %v117, %v116
    %v130 = vpack.c.b16 %v119, %v118
    %v131 = vpack.c.b16 %v121, %v120
    %v132 = vpack.c.b16 %v123, %v122
    %v133 = vpack.c.b16 %v125, %v124
    %142 = vmatprep.subr.bf16.mxu0 0
    %143 = vmatpush1.bf16.msra.mxu0 %v126
    %144 = vmatprep.subr.bf16.mxu0 0
    %145 = vmatpush1.bf16.msra.mxu0 %v127
    %146 = vmatprep.subr.bf16.mxu0 0
    %147 = vmatpush1.bf16.msra.mxu0 %v128
    %148 = vmatprep.subr.bf16.mxu0 0
    %149 = vmatpush1.bf16.msra.mxu0 %v129
    %150 = vmatprep.subr.bf16.mxu0 0
    %151 = vmatpush1.bf16.msra.mxu0 %v130
    %152 = vmatprep.subr.bf16.mxu0 0
    %153 = vmatpush1.bf16.msra.mxu0 %v131
    %154 = vmatprep.subr.bf16.mxu0 0
    %155 = vmatpush1.bf16.msra.mxu0 %v132
    %156 = vmatprep.subr.bf16.mxu0 0
    %157 = vmatpush1.bf16.msra.mxu0 %v133
    %158 = vmatprep.subr.bf16.mxu0 0
    %159 = vmatpush1.bf16.msra.mxu0 0
    %160 = vmatprep.subr.bf16.mxu0 0
    %161 = vmatpush1.bf16.msra.mxu0 0
    %162 = vmatprep.subr.bf16.mxu0 0
    %163 = vmatpush1.bf16.msra.mxu0 0
    %164 = vmatprep.subr.bf16.mxu0 0
    %165 = vmatpush1.bf16.msra.mxu0 0
    %166 = vmatprep.subr.bf16.mxu0 0
    %167 = vmatpush1.bf16.msra.mxu0 0
    %168 = vmatprep.subr.bf16.mxu0 0
    %169 = vmatpush1.bf16.msra.mxu0 0
    %170 = vmatprep.subr.bf16.mxu0 0
    %171 = vmatpush1.bf16.msra.mxu0 0
    %172 = vmatprep.subr.bf16.mxu0 0
    %173 = vmatpush1.bf16.msra.mxu0 0
    %174 = vmatprep.mubr.bf16.mxu0 0
    %175 = vmatmul.mubr.bf16.gmra.mrb[0].mxu0 %v92
    %v176 = vpop.f32.mrb[0].mxu0
    %v177 = vadd.f32 %v86, %v176
    %v178 = vpop.f32.mrb[0].mxu0
    %v179 = vpop.f32.mrb[0].mxu0
    %v180 = vadd.f32 %v86, %v179
    %v181 = vpop.f32.mrb[0].mxu0
    %182 = vdwg.mxu0
    %v183 = vpack.c.bf16 %v180, %v177
    %v184 = vmax.bf16 %v183, 0
    %v185 = vld [vmem:[#allocation7] sm:$0xf]
    %v186 = vld [vmem:[#allocation7 + $0x4] sm:$0xf]
    %v187 = vld [vmem:[#allocation7 + $0x8] sm:$0xf]
    %v188 = vld [vmem:[#allocation7 + $0xc] sm:$0xf]
    %v189 = vld [vmem:[#allocation7 + $0x10] sm:$0xf]
    %v190 = vld [vmem:[#allocation7 + $0x14] sm:$0xf]
    %v191 = vld [vmem:[#allocation7 + $0x18] sm:$0xf]
    %v192 = vld [vmem:[#allocation7 + $0x1c] sm:$0xf]
    %v193 = vld [vmem:[#allocation7 + $0x20] sm:$0xf]
    %v194 = vld [vmem:[#allocation7 + $0x24] sm:$0xf]
    %v195 = vld [vmem:[#allocation7 + $0x28] sm:$0xf]
    %v196 = vld [vmem:[#allocation7 + $0x2c] sm:$0xf]
    %v197 = vld [vmem:[#allocation7 + $0x30] sm:$0xf]
    %v198 = vld [vmem:[#allocation7 + $0x34] sm:$0xf]
    %v199 = vld [vmem:[#allocation7 + $0x38] sm:$0xf]
    %v200 = vld [vmem:[#allocation7 + $0x3c] sm:$0xf]
    %v201 = vld [vmem:[%s4] sm:$0x1]
    %v203 = vlaneseq
    %v204 = vshrl.u32 %v203, 7
    %v205 = vsub.s32 0, %v204
    %v206 = vrot.slane %v201, %v205
    %v224 = vunpack.c.l.b16 %v185
    %v225 = vunpack.c.l.b16 %v186
    %v226 = vunpack.c.l.b16 %v187
    %v227 = vunpack.c.l.b16 %v188
    %v228 = vunpack.c.l.b16 %v189
    %v229 = vunpack.c.l.b16 %v190
    %v230 = vunpack.c.l.b16 %v191
    %v231 = vunpack.c.l.b16 %v192
    %v232 = vunpack.c.l.b16 %v193
    %v233 = vunpack.c.l.b16 %v194
    %v234 = vunpack.c.l.b16 %v195
    %v235 = vunpack.c.l.b16 %v196
    %v236 = vunpack.c.l.b16 %v197
    %v237 = vunpack.c.l.b16 %v198
    %v238 = vunpack.c.l.b16 %v199
    %v239 = vunpack.c.l.b16 %v200
    %v240 = vpack.c.b16 %v225, %v224
    %v241 = vpack.c.b16 %v227, %v226
    %v242 = vpack.c.b16 %v229, %v228
    %v243 = vpack.c.b16 %v231, %v230
    %v244 = vpack.c.b16 %v233, %v232
    %v245 = vpack.c.b16 %v235, %v234
    %v246 = vpack.c.b16 %v237, %v236
    %v247 = vpack.c.b16 %v239, %v238
    %256 = vmatprep.subr.bf16.mxu0 0
    %257 = vmatpush1.bf16.msra.mxu0 %v240
    %258 = vmatprep.subr.bf16.mxu0 0
    %259 = vmatpush1.bf16.msra.mxu0 %v241
    %260 = vmatprep.subr.bf16.mxu0 0
    %261 = vmatpush1.bf16.msra.mxu0 %v242
    %262 = vmatprep.subr.bf16.mxu0 0
    %263 = vmatpush1.bf16.msra.mxu0 %v243
    %264 = vmatprep.subr.bf16.mxu0 0
    %265 = vmatpush1.bf16.msra.mxu0 %v244
    %266 = vmatprep.subr.bf16.mxu0 0
    %267 = vmatpush1.bf16.msra.mxu0 %v245
    %268 = vmatprep.subr.bf16.mxu0 0
    %269 = vmatpush1.bf16.msra.mxu0 %v246
    %270 = vmatprep.subr.bf16.mxu0 0
    %271 = vmatpush1.bf16.msra.mxu0 %v247
    %272 = vmatprep.subr.bf16.mxu0 0
    %273 = vmatpush1.bf16.msra.mxu0 0
    %274 = vmatprep.subr.bf16.mxu0 0
    %275 = vmatpush1.bf16.msra.mxu0 0
    %276 = vmatprep.subr.bf16.mxu0 0
    %277 = vmatpush1.bf16.msra.mxu0 0
    %278 = vmatprep.subr.bf16.mxu0 0
    %279 = vmatpush1.bf16.msra.mxu0 0
    %280 = vmatprep.subr.bf16.mxu0 0
    %281 = vmatpush1.bf16.msra.mxu0 0
    %282 = vmatprep.subr.bf16.mxu0 0
    %283 = vmatpush1.bf16.msra.mxu0 0
    %284 = vmatprep.subr.bf16.mxu0 0
    %285 = vmatpush1.bf16.msra.mxu0 0
    %286 = vmatprep.subr.bf16.mxu0 0
    %287 = vmatpush1.bf16.msra.mxu0 0
    %288 = vmatprep.mubr.bf16.mxu0 0
    %289 = vmatmul.mubr.bf16.gmra.mrb[0].mxu0 %v184
    %v290 = vpop.f32.mrb[0].mxu0
    %v291 = vadd.f32 %v206, %v290
    %v292 = vpop.f32.mrb[0].mxu0
    %v293 = vpop.f32.mrb[0].mxu0
    %v294 = vadd.f32 %v206, %v293
    %v295 = vpop.f32.mrb[0].mxu0
    %296 = vdwg.mxu0
    %297 = vst [vmem:[#allocation8] sm:$0xff] %v291
    %298 = vst [vmem:[#allocation8 + $0x8] sm:$0xff] %v294
    // Predicated region
    $region34: #{tpu_custom_call.1} parent=1 // pred_check
      _
    $region35: #{tpu_custom_call.1} parent=1 // pred_check_branch
      %300 = sbr.rel (0) target = $region37
    $region36: #{tpu_custom_call.1} parent=1 // pred_region
      %s302 = ssub.s32 256, 256
      %303 = vsyncadd [#allocation4], %s302
      %s304 = sshll.u32 [#allocation8], 4
      %s305 = int_to_ptr.vmem [resolvable:$true] %s304
      %310 = dma.vmem_to_hbm [thread:$0]  %s305, 256, %s5, [#allocation4], 128, 128, 8
    $region37: #{tpu_custom_call.1} parent=1 // pred_fallthru
      _
    // Predicated region
    $region38: #{tpu_custom_call.1} parent=1 // pred_check
      _
    $region39: #{tpu_custom_call.1} parent=1 // pred_check_branch
      %312 = sbr.rel (0) target = $region41
    $region40: #{tpu_custom_call.1} parent=1 // pred_region
      %313 = dma.done [#allocation4], 256
    $region41: #{tpu_custom_call.1} parent=1 // pred_fallthru
      _
    %314 = vsyncpa [#allocation3], 1
    %315 = vsyncpa [#allocation6], 1
    %316 = vsyncpa [#allocation4], 1

</llo_original>
